<compile_context>
chip_gen: v5e
topology: v5e:2x2
jax: 0.10.0
libtpu: 0.0.40
codegen_flags: <defaults>
</compile_context>

<pallas_src>
import functools

import jax
import jax.numpy as jnp
import numpy as np
from jax.experimental import pallas as pl
from jax.experimental.pallas import tpu as pltpu


def _round_up(n, m):
    return ((n + m - 1) // m) * m


# ----------------------------------------------------------------------------- #
# Fused Encode kernel: h0 = fc5(xi); LSTM over S steps; z = fc21(h_T)
# ----------------------------------------------------------------------------- #
def _encode_kernel(x_ref, xi_ref, wih_ref, whh_ref, b_ref,
                   wfc5_ref, bfc5_ref, wfc21_ref, bfc21_ref,
                   z_ref, xp_ref, *, seq, b_pad, hidden):
    Bp, H = b_pad, hidden
    bf16 = jnp.bfloat16

    # --- Hoisted input projection for ALL timesteps: one bf16 MXU matmul. --- #
    # x_ref: (S*Bp, X) f32, wih_ref: (X, GWp) bf16  ->  xp_ref: (S*Bp, GWp) f32
    xp_ref[...] = (
        jnp.dot(x_ref[...].astype(bf16), wih_ref[...],
                preferred_element_type=jnp.float32)
        + b_ref[...]
    )

    # --- h0 = fc5(xi) in f32 (single tiny matmul, keeps initial state exact),
    #     c0 = 0. --- #
    h0 = (jnp.dot(xi_ref[...], wfc5_ref[...], preferred_element_type=jnp.float32)
          + bfc5_ref[...])                       # (Bp, H) f32
    c0 = jnp.zeros((Bp, H), jnp.float32)

    # Loop-invariant recurrent weight: load once, keep in registers.
    whh = whh_ref[...]                            # (H, GWp) bf16

    # --- Recurrence: only h @ W_hh^T sits on the serial critical path. --- #
    # PyTorch gate order (i, f, g, o) packed contiguously: 4*H = 128 lanes.
    def step(t, carry):
        h, c = carry                              # (Bp, H) f32 each
        gates = (xp_ref[pl.ds(t * Bp, Bp), :]
                 + jnp.dot(h.astype(bf16), whh,
                           preferred_element_type=jnp.float32))   # (Bp, 4H) f32
        i_g = jax.nn.sigmoid(gates[:, 0 * H:1 * H])
        f_g = jax.nn.sigmoid(gates[:, 1 * H:2 * H])
        g_g = jnp.tanh(gates[:, 2 * H:3 * H])
        o_g = jax.nn.sigmoid(gates[:, 3 * H:4 * H])
        c_new = f_g * c + i_g * g_g
        h_new = o_g * jnp.tanh(c_new)
        return h_new, c_new

    h_T, _ = jax.lax.fori_loop(0, seq, step, (h0, c0), unroll=True)

    # --- z = fc21(h_T).  Dropout is identity in eval mode. --- #
    # TODO(synk): training-mode dropout (nn.Dropout) not applied; eval semantics.
    z = (jnp.dot(h_T.astype(bf16), wfc21_ref[...],
                 preferred_element_type=jnp.float32)
         + bfc21_ref[...])
    z_ref[...] = z.astype(z_ref.dtype)            # (Bp, Zp) lane-dense


def encode_pallas(x_flat, xi_p, wih, whh, b, wfc5, bfc5, wfc21, bfc21,
                  *, seq, b_pad, hidden):
    """All inputs pre-padded; returns padded z slab (b_pad, z_pad)."""
    gwp = wih.shape[1]
    z_pad = wfc21.shape[1]
    kernel = functools.partial(_encode_kernel, seq=seq, b_pad=b_pad, hidden=hidden)

    def full_spec(a):
        return pl.BlockSpec(a.shape, lambda i: (0,) * a.ndim)

    inputs = (x_flat, xi_p, wih, whh, b, wfc5, bfc5, wfc21, bfc21)
    specs = [full_spec(a) for a in inputs]

    return pl.pallas_call(
        kernel,
        out_shape=jax.ShapeDtypeStruct((b_pad, z_pad), jnp.float32),
        grid_spec=pltpu.PrefetchScalarGridSpec(
            num_scalar_prefetch=0,
            grid=(1,),
            in_specs=specs,
            out_specs=pl.BlockSpec((b_pad, z_pad), lambda i: (0, 0)),
            scratch_shapes=[
                pltpu.VMEM((seq * b_pad, gwp), jnp.float32),   # hoisted x-proj
            ],
        ),
        # Single grid point; a leading "parallel" batch axis would be added
        # here if the caller batched many sequences (v7x dual-TC win).
        compiler_params=pltpu.CompilerParams(dimension_semantics=("arbitrary",)),
    )(*inputs)


# ----------------------------------------------------------------------------- #
# Parameter construction (deterministic, mirrors PyTorch __init__/init_weights)
# ----------------------------------------------------------------------------- #
def make_params(key, x_dim, z_dim, hidden_dim):
    ks = jax.random.split(key, 6)
    H = hidden_dim
    stdv = 1.0 / np.sqrt(H)                 # PyTorch nn.LSTM default init
    w_ih = jax.random.uniform(ks[0], (4 * H, x_dim), jnp.float32, -stdv, stdv)
    w_hh = jax.random.uniform(ks[1], (4 * H, H), jnp.float32, -stdv, stdv)
    b_ih = jax.random.uniform(ks[2], (4 * H,), jnp.float32, -stdv, stdv)
    b_hh = jax.random.uniform(ks[3], (4 * H,), jnp.float32, -stdv, stdv)
    # init_weights(): uniform(-0.1, 0.1) weights, zero biases
    w_fc21 = jax.random.uniform(ks[4], (z_dim, H), jnp.float32, -0.1, 0.1)
    b_fc21 = jnp.zeros((z_dim,), jnp.float32)
    w_fc5 = jax.random.uniform(ks[5], (H, z_dim), jnp.float32, -0.1, 0.1)
    b_fc5 = jnp.zeros((H,), jnp.float32)
    return dict(w_ih=w_ih, w_hh=w_hh, b_ih=b_ih, b_hh=b_hh,
                w_fc21=w_fc21, b_fc21=b_fc21, w_fc5=w_fc5, b_fc5=b_fc5)


def prepare_params(params):
    """One-time layout plumbing.

    Gates stay in PyTorch's native packed (i,f,g,o) order: 4*H contiguous
    columns (padded up to a multiple of 128 lanes only if needed).  MXU
    operand weights are stored in bf16; biases stay f32 (added after the
    f32-accumulated matmul).  Padding columns are exact zeros.
    """
    H = params["w_hh"].shape[1]
    x_dim = params["w_ih"].shape[1]
    z_dim = params["w_fc21"].shape[0]
    gw = 4 * H
    gwp = _round_up(gw, 128)                # 128 for H=32 (no padding needed)
    zp = _round_up(z_dim, 128)
    bf16 = jnp.bfloat16

    wih = (jnp.zeros((x_dim, gwp), bf16)
           .at[:, :gw].set(params["w_ih"].T.astype(bf16)))          # (X, GWp)
    whh = (jnp.zeros((H, gwp), bf16)
           .at[:, :gw].set(params["w_hh"].T.astype(bf16)))          # (H, GWp)
    b = (jnp.zeros((1, gwp), jnp.float32)
         .at[0, :gw].set(params["b_ih"] + params["b_hh"]))          # (1, GWp)

    wfc5 = params["w_fc5"].T.astype(jnp.float32)                    # (z_dim, H)
    bfc5 = params["b_fc5"].reshape(1, H).astype(jnp.float32)        # (1, H)

    wfc21 = (jnp.zeros((H, zp), bf16)
             .at[:, :z_dim].set(params["w_fc21"].T.astype(bf16)))   # (H, Zp)
    bfc21 = (jnp.zeros((1, zp), jnp.float32)
             .at[0, :z_dim].set(params["b_fc21"]))                  # (1, Zp)

    return dict(wih=wih, whh=whh, b=b, wfc5=wfc5, bfc5=bfc5,
                wfc21=wfc21, bfc21=bfc21)


# ----------------------------------------------------------------------------- #
# Encode.forward (jitted: pad + reshape + pallas_call + slice = one dispatch)
# ----------------------------------------------------------------------------- #
@jax.jit
def encode_forward(weights, x, xi):
    """x: (seq, bsz, x_dim), xi: (bsz, z_dim) -> (z: (bsz, z_dim), xi)."""
    S, B, X = x.shape
    z_dim = xi.shape[1]
    H = weights["whh"].shape[0]
    Bp = _round_up(B, 8)

    # Layout plumbing: pad batch to 8 sublanes, flatten (S, Bp, X) -> (S*Bp, X).
    x_p = (jnp.zeros((S, Bp, X), jnp.float32)
           .at[:, :B, :].set(x.astype(jnp.float32))
           .reshape(S * Bp, X))
    xi_p = jnp.zeros((Bp, z_dim), jnp.float32).at[:B, :].set(xi.astype(jnp.float32))

    z_slab = encode_pallas(
        x_p, xi_p, weights["wih"], weights["whh"], weights["b"],
        weights["wfc5"], weights["bfc5"], weights["wfc21"], weights["bfc21"],
        seq=S, b_pad=Bp, hidden=H)

    return z_slab[:B, :z_dim], xi


# ----------------------------------------------------------------------------- #
# Pure-JAX reference for verification (full f32, highest matmul precision)
# ----------------------------------------------------------------------------- #
def encode_reference(params, x, xi):
    H = params["w_hh"].shape[1]
    hi = jax.lax.Precision.HIGHEST
    h = jnp.dot(xi, params["w_fc5"].T, precision=hi) + params["b_fc5"]
    c = jnp.zeros_like(h)
    for t in range(x.shape[0]):
        gates = (jnp.dot(x[t], params["w_ih"].T, precision=hi) + params["b_ih"]
                 + jnp.dot(h, params["w_hh"].T, precision=hi) + params["b_hh"])
        i_g = jax.nn.sigmoid(gates[:, 0 * H:1 * H])
        f_g = jax.nn.sigmoid(gates[:, 1 * H:2 * H])
        g_g = jnp.tanh(gates[:, 2 * H:3 * H])
        o_g = jax.nn.sigmoid(gates[:, 3 * H:4 * H])
        c = f_g * c + i_g * g_g
        h = o_g * jnp.tanh(c)
    z = jnp.dot(h, params["w_fc21"].T, precision=hi) + params["b_fc21"]
    return z, xi


if __name__ == "__main__":
    # Small shapes consistent with the module: seq=8, bsz=4, x_dim=16, hidden=32, z_dim=8.
    seq, bsz, x_dim, hidden_dim, z_dim = 8, 4, 16, 32, 8

    key = jax.random.PRNGKey(0)
    k_params, k_x, k_xi = jax.random.split(key, 3)

    params = make_params(k_params, x_dim, z_dim, hidden_dim)
    weights = prepare_params(params)

    x = jax.random.normal(k_x, (seq, bsz, x_dim), jnp.float32)   # (seq, bsz, x_dim)
    xi = jax.random.normal(k_xi, (bsz, z_dim), jnp.float32)      # the torch.randn noise

    z, xi_out = jax.block_until_ready(encode_forward(weights, x, xi))
    z_ref, _ = encode_reference(params, x, xi)

    # bf16 MXU operands (per performance review) -> relaxed tolerance vs f32 golden.
    np.testing.assert_allclose(np.asarray(z), np.asarray(z_ref), rtol=2e-2, atol=2e-2)
    assert z.shape == (bsz, z_dim) and xi_out.shape == (bsz, z_dim)
    print("KERNEL_OK")
</pallas_src>

<mosaic_0001>
module attributes {stable_mosaic.version = 11 : i64} {
  func.func @_encode_kernel(%arg0: i32, %arg1: memref<64x16xf32, #tpu.memory_space<vmem>>, %arg2: memref<8x8xf32, #tpu.memory_space<vmem>>, %arg3: memref<16x128xbf16, #tpu.memory_space<vmem>>, %arg4: memref<32x128xbf16, #tpu.memory_space<vmem>>, %arg5: memref<1x128xf32, #tpu.memory_space<vmem>>, %arg6: memref<8x32xf32, #tpu.memory_space<vmem>>, %arg7: memref<1x32xf32, #tpu.memory_space<vmem>>, %arg8: memref<32x128xbf16, #tpu.memory_space<vmem>>, %arg9: memref<1x128xf32, #tpu.memory_space<vmem>>, %arg10: memref<8x128xf32, #tpu.memory_space<vmem>>, %arg11: memref<64x128xf32, #tpu.memory_space<vmem>>) attributes {dimension_semantics = [#tpu.dimension_semantics<arbitrary>], iteration_bounds = array<i64: 1>, scalar_prefetch = 0 : i64, scratch_operands = 1 : i64, tpu.core_type = #tpu.core_type<tc>, window_params = [{pipeline_mode = #tpu.pipeline_mode<synchronous>, transform_indices = @transform_0, window_bounds = array<i64: 64, 16>}, {pipeline_mode = #tpu.pipeline_mode<synchronous>, transform_indices = @transform_1, window_bounds = array<i64: 8, 8>}, {pipeline_mode = #tpu.pipeline_mode<synchronous>, transform_indices = @transform_2, window_bounds = array<i64: 16, 128>}, {pipeline_mode = #tpu.pipeline_mode<synchronous>, transform_indices = @transform_3, window_bounds = array<i64: 32, 128>}, {pipeline_mode = #tpu.pipeline_mode<synchronous>, transform_indices = @transform_4, window_bounds = array<i64: 1, 128>}, {pipeline_mode = #tpu.pipeline_mode<synchronous>, transform_indices = @transform_5, window_bounds = array<i64: 8, 32>}, {pipeline_mode = #tpu.pipeline_mode<synchronous>, transform_indices = @transform_6, window_bounds = array<i64: 1, 32>}, {pipeline_mode = #tpu.pipeline_mode<synchronous>, transform_indices = @transform_7, window_bounds = array<i64: 32, 128>}, {pipeline_mode = #tpu.pipeline_mode<synchronous>, transform_indices = @transform_8, window_bounds = array<i64: 1, 128>}, {pipeline_mode = #tpu.pipeline_mode<synchronous>, transform_indices = @transform_9, window_bounds = array<i64: 8, 128>}]} {
    %c0 = arith.constant 0 : index
    %c0_0 = arith.constant 0 : index
    %0 = vector.load %arg1[%c0, %c0_0] : memref<64x16xf32, #tpu.memory_space<vmem>>, vector<64x16xf32>
    %1 = arith.truncf %0 : vector<64x16xf32> to vector<64x16xbf16>
    %c0_1 = arith.constant 0 : index
    %c0_2 = arith.constant 0 : index
    %2 = vector.load %arg3[%c0_1, %c0_2] : memref<16x128xbf16, #tpu.memory_space<vmem>>, vector<16x128xbf16>
    %cst = arith.constant dense<0.000000e+00> : vector<64x128xf32>
    %3 = tpu.matmul %1, %2, %cst {dimension_numbers = #tpu.dot_dimension_numbers<[1], [0], [0], [1], [0, 0, 1, 1], [], []>} : vector<64x16xbf16>, vector<16x128xbf16>, vector<64x128xf32> -> vector<64x128xf32>
    %c0_3 = arith.constant 0 : index
    %c0_4 = arith.constant 0 : index
    %4 = vector.load %arg5[%c0_3, %c0_4] : memref<1x128xf32, #tpu.memory_space<vmem>>, vector<1x128xf32>
    %5 = vector.broadcast %4 : vector<1x128xf32> to vector<64x128xf32>
    %6 = arith.addf %3, %5 : vector<64x128xf32>
    %c0_5 = arith.constant 0 : index
    %c0_6 = arith.constant 0 : index
    %7 = vector.load %arg11[%c0_5, %c0_6] : memref<64x128xf32, #tpu.memory_space<vmem>>, vector<64x128xf32>
    tpu.vector_store %arg11[%c0_5, %c0_6], %6 {strides = array<i32>} : memref<64x128xf32, #tpu.memory_space<vmem>>, vector<64x128xf32>,
    %c0_7 = arith.constant 0 : index
    %c0_8 = arith.constant 0 : index
    %8 = vector.load %arg2[%c0_7, %c0_8] : memref<8x8xf32, #tpu.memory_space<vmem>>, vector<8x8xf32>
    %c0_9 = arith.constant 0 : index
    %c0_10 = arith.constant 0 : index
    %9 = vector.load %arg6[%c0_9, %c0_10] : memref<8x32xf32, #tpu.memory_space<vmem>>, vector<8x32xf32>
    %cst_11 = arith.constant dense<0.000000e+00> : vector<8x32xf32>
    %10 = tpu.matmul %8, %9, %cst_11 {dimension_numbers = #tpu.dot_dimension_numbers<[1], [0], [0], [1], [0, 0, 1, 1], [], []>} : vector<8x8xf32>, vector<8x32xf32>, vector<8x32xf32> -> vector<8x32xf32>
    %c0_12 = arith.constant 0 : index
    %c0_13 = arith.constant 0 : index
    %11 = vector.load %arg7[%c0_12, %c0_13] : memref<1x32xf32, #tpu.memory_space<vmem>>, vector<1x32xf32>
    %12 = vector.broadcast %11 : vector<1x32xf32> to vector<8x32xf32>
    %13 = arith.addf %10, %12 : vector<8x32xf32>
    %cst_14 = arith.constant 0.000000e+00 : f32
    %14 = vector.broadcast %cst_14 : f32 to vector<8x32xf32>
    %c0_15 = arith.constant 0 : index
    %c0_16 = arith.constant 0 : index
    %15 = vector.load %arg4[%c0_15, %c0_16] : memref<32x128xbf16, #tpu.memory_space<vmem>>, vector<32x128xbf16>
    %c0_i32 = arith.constant 0 : i32
    %c8_i32 = arith.constant 8 : i32
    %16 = arith.muli %c0_i32, %c8_i32 : i32
    %17 = arith.index_cast %16 : i32 to index
    %c0_17 = arith.constant 0 : index
    %18 = vector.load %arg11[%17, %c0_17] : memref<64x128xf32, #tpu.memory_space<vmem>>, vector<8x128xf32>
    %19 = arith.truncf %13 : vector<8x32xf32> to vector<8x32xbf16>
    %cst_18 = arith.constant dense<0.000000e+00> : vector<8x128xf32>
    %20 = tpu.matmul %19, %15, %cst_18 {dimension_numbers = #tpu.dot_dimension_numbers<[1], [0], [0], [1], [0, 0, 1, 1], [], []>} : vector<8x32xbf16>, vector<32x128xbf16>, vector<8x128xf32> -> vector<8x128xf32>
    %21 = arith.addf %18, %20 : vector<8x128xf32>
    %22 = vector.extract_strided_slice %21 {offsets = [0, 0], sizes = [8, 32], strides = [1, 1]} : vector<8x128xf32> to vector<8x32xf32>
    %23 = arith.negf %22 : vector<8x32xf32>
    %24 = math.exp %23 : vector<8x32xf32>
    %cst_19 = arith.constant 1.000000e+00 : f32
    %25 = vector.broadcast %cst_19 : f32 to vector<8x32xf32>
    %26 = arith.addf %25, %24 : vector<8x32xf32>
    %27 = arith.divf %25, %26 : vector<8x32xf32>
    %28 = vector.extract_strided_slice %21 {offsets = [0, 32], sizes = [8, 32], strides = [1, 1]} : vector<8x128xf32> to vector<8x32xf32>
    %29 = arith.negf %28 : vector<8x32xf32>
    %30 = math.exp %29 : vector<8x32xf32>
    %cst_20 = arith.constant 1.000000e+00 : f32
    %31 = vector.broadcast %cst_20 : f32 to vector<8x32xf32>
    %32 = arith.addf %31, %30 : vector<8x32xf32>
    %33 = arith.divf %31, %32 : vector<8x32xf32>
    %34 = vector.extract_strided_slice %21 {offsets = [0, 64], sizes = [8, 32], strides = [1, 1]} : vector<8x128xf32> to vector<8x32xf32>
    %35 = math.tanh %34 : vector<8x32xf32>
    %36 = vector.extract_strided_slice %21 {offsets = [0, 96], sizes = [8, 32], strides = [1, 1]} : vector<8x128xf32> to vector<8x32xf32>
    %37 = arith.negf %36 : vector<8x32xf32>
    %38 = math.exp %37 : vector<8x32xf32>
    %cst_21 = arith.constant 1.000000e+00 : f32
    %39 = vector.broadcast %cst_21 : f32 to vector<8x32xf32>
    %40 = arith.addf %39, %38 : vector<8x32xf32>
    %41 = arith.divf %39, %40 : vector<8x32xf32>
    %42 = arith.mulf %33, %14 : vector<8x32xf32>
    %43 = arith.mulf %27, %35 : vector<8x32xf32>
    %44 = arith.addf %42, %43 : vector<8x32xf32>
    %45 = math.tanh %44 : vector<8x32xf32>
    %46 = arith.mulf %41, %45 : vector<8x32xf32>
    %c1_i32 = arith.constant 1 : i32
    %c8_i32_22 = arith.constant 8 : i32
    %47 = arith.muli %c1_i32, %c8_i32_22 : i32
    %48 = arith.index_cast %47 : i32 to index
    %c0_23 = arith.constant 0 : index
    %49 = vector.load %arg11[%48, %c0_23] : memref<64x128xf32, #tpu.memory_space<vmem>>, vector<8x128xf32>
    %50 = arith.truncf %46 : vector<8x32xf32> to vector<8x32xbf16>
    %cst_24 = arith.constant dense<0.000000e+00> : vector<8x128xf32>
    %51 = tpu.matmul %50, %15, %cst_24 {dimension_numbers = #tpu.dot_dimension_numbers<[1], [0], [0], [1], [0, 0, 1, 1], [], []>} : vector<8x32xbf16>, vector<32x128xbf16>, vector<8x128xf32> -> vector<8x128xf32>
    %52 = arith.addf %49, %51 : vector<8x128xf32>
    %53 = vector.extract_strided_slice %52 {offsets = [0, 0], sizes = [8, 32], strides = [1, 1]} : vector<8x128xf32> to vector<8x32xf32>
    %54 = arith.negf %53 : vector<8x32xf32>
    %55 = math.exp %54 : vector<8x32xf32>
    %cst_25 = arith.constant 1.000000e+00 : f32
    %56 = vector.broadcast %cst_25 : f32 to vector<8x32xf32>
    %57 = arith.addf %56, %55 : vector<8x32xf32>
    %58 = arith.divf %56, %57 : vector<8x32xf32>
    %59 = vector.extract_strided_slice %52 {offsets = [0, 32], sizes = [8, 32], strides = [1, 1]} : vector<8x128xf32> to vector<8x32xf32>
    %60 = arith.negf %59 : vector<8x32xf32>
    %61 = math.exp %60 : vector<8x32xf32>
    %cst_26 = arith.constant 1.000000e+00 : f32
    %62 = vector.broadcast %cst_26 : f32 to vector<8x32xf32>
    %63 = arith.addf %62, %61 : vector<8x32xf32>
    %64 = arith.divf %62, %63 : vector<8x32xf32>
    %65 = vector.extract_strided_slice %52 {offsets = [0, 64], sizes = [8, 32], strides = [1, 1]} : vector<8x128xf32> to vector<8x32xf32>
    %66 = math.tanh %65 : vector<8x32xf32>
    %67 = vector.extract_strided_slice %52 {offsets = [0, 96], sizes = [8, 32], strides = [1, 1]} : vector<8x128xf32> to vector<8x32xf32>
    %68 = arith.negf %67 : vector<8x32xf32>
    %69 = math.exp %68 : vector<8x32xf32>
    %cst_27 = arith.constant 1.000000e+00 : f32
    %70 = vector.broadcast %cst_27 : f32 to vector<8x32xf32>
    %71 = arith.addf %70, %69 : vector<8x32xf32>
    %72 = arith.divf %70, %71 : vector<8x32xf32>
    %73 = arith.mulf %64, %44 : vector<8x32xf32>
    %74 = arith.mulf %58, %66 : vector<8x32xf32>
    %75 = arith.addf %73, %74 : vector<8x32xf32>
    %76 = math.tanh %75 : vector<8x32xf32>
    %77 = arith.mulf %72, %76 : vector<8x32xf32>
    %c2_i32 = arith.constant 2 : i32
    %c8_i32_28 = arith.constant 8 : i32
    %78 = arith.muli %c2_i32, %c8_i32_28 : i32
    %79 = arith.index_cast %78 : i32 to index
    %c0_29 = arith.constant 0 : index
    %80 = vector.load %arg11[%79, %c0_29] : memref<64x128xf32, #tpu.memory_space<vmem>>, vector<8x128xf32>
    %81 = arith.truncf %77 : vector<8x32xf32> to vector<8x32xbf16>
    %cst_30 = arith.constant dense<0.000000e+00> : vector<8x128xf32>
    %82 = tpu.matmul %81, %15, %cst_30 {dimension_numbers = #tpu.dot_dimension_numbers<[1], [0], [0], [1], [0, 0, 1, 1], [], []>} : vector<8x32xbf16>, vector<32x128xbf16>, vector<8x128xf32> -> vector<8x128xf32>
    %83 = arith.addf %80, %82 : vector<8x128xf32>
    %84 = vector.extract_strided_slice %83 {offsets = [0, 0], sizes = [8, 32], strides = [1, 1]} : vector<8x128xf32> to vector<8x32xf32>
    %85 = arith.negf %84 : vector<8x32xf32>
    %86 = math.exp %85 : vector<8x32xf32>
    %cst_31 = arith.constant 1.000000e+00 : f32
    %87 = vector.broadcast %cst_31 : f32 to vector<8x32xf32>
    %88 = arith.addf %87, %86 : vector<8x32xf32>
    %89 = arith.divf %87, %88 : vector<8x32xf32>
    %90 = vector.extract_strided_slice %83 {offsets = [0, 32], sizes = [8, 32], strides = [1, 1]} : vector<8x128xf32> to vector<8x32xf32>
    %91 = arith.negf %90 : vector<8x32xf32>
    %92 = math.exp %91 : vector<8x32xf32>
    %cst_32 = arith.constant 1.000000e+00 : f32
    %93 = vector.broadcast %cst_32 : f32 to vector<8x32xf32>
    %94 = arith.addf %93, %92 : vector<8x32xf32>
    %95 = arith.divf %93, %94 : vector<8x32xf32>
    %96 = vector.extract_strided_slice %83 {offsets = [0, 64], sizes = [8, 32], strides = [1, 1]} : vector<8x128xf32> to vector<8x32xf32>
    %97 = math.tanh %96 : vector<8x32xf32>
    %98 = vector.extract_strided_slice %83 {offsets = [0, 96], sizes = [8, 32], strides = [1, 1]} : vector<8x128xf32> to vector<8x32xf32>
    %99 = arith.negf %98 : vector<8x32xf32>
    %100 = math.exp %99 : vector<8x32xf32>
    %cst_33 = arith.constant 1.000000e+00 : f32
    %101 = vector.broadcast %cst_33 : f32 to vector<8x32xf32>
    %102 = arith.addf %101, %100 : vector<8x32xf32>
    %103 = arith.divf %101, %102 : vector<8x32xf32>
    %104 = arith.mulf %95, %75 : vector<8x32xf32>
    %105 = arith.mulf %89, %97 : vector<8x32xf32>
    %106 = arith.addf %104, %105 : vector<8x32xf32>
    %107 = math.tanh %106 : vector<8x32xf32>
    %108 = arith.mulf %103, %107 : vector<8x32xf32>
    %c3_i32 = arith.constant 3 : i32
    %c8_i32_34 = arith.constant 8 : i32
    %109 = arith.muli %c3_i32, %c8_i32_34 : i32
    %110 = arith.index_cast %109 : i32 to index
    %c0_35 = arith.constant 0 : index
    %111 = vector.load %arg11[%110, %c0_35] : memref<64x128xf32, #tpu.memory_space<vmem>>, vector<8x128xf32>
    %112 = arith.truncf %108 : vector<8x32xf32> to vector<8x32xbf16>
    %cst_36 = arith.constant dense<0.000000e+00> : vector<8x128xf32>
    %113 = tpu.matmul %112, %15, %cst_36 {dimension_numbers = #tpu.dot_dimension_numbers<[1], [0], [0], [1], [0, 0, 1, 1], [], []>} : vector<8x32xbf16>, vector<32x128xbf16>, vector<8x128xf32> -> vector<8x128xf32>
    %114 = arith.addf %111, %113 : vector<8x128xf32>
    %115 = vector.extract_strided_slice %114 {offsets = [0, 0], sizes = [8, 32], strides = [1, 1]} : vector<8x128xf32> to vector<8x32xf32>
    %116 = arith.negf %115 : vector<8x32xf32>
    %117 = math.exp %116 : vector<8x32xf32>
    %cst_37 = arith.constant 1.000000e+00 : f32
    %118 = vector.broadcast %cst_37 : f32 to vector<8x32xf32>
    %119 = arith.addf %118, %117 : vector<8x32xf32>
    %120 = arith.divf %118, %119 : vector<8x32xf32>
    %121 = vector.extract_strided_slice %114 {offsets = [0, 32], sizes = [8, 32], strides = [1, 1]} : vector<8x128xf32> to vector<8x32xf32>
    %122 = arith.negf %121 : vector<8x32xf32>
    %123 = math.exp %122 : vector<8x32xf32>
    %cst_38 = arith.constant 1.000000e+00 : f32
    %124 = vector.broadcast %cst_38 : f32 to vector<8x32xf32>
    %125 = arith.addf %124, %123 : vector<8x32xf32>
    %126 = arith.divf %124, %125 : vector<8x32xf32>
    %127 = vector.extract_strided_slice %114 {offsets = [0, 64], sizes = [8, 32], strides = [1, 1]} : vector<8x128xf32> to vector<8x32xf32>
    %128 = math.tanh %127 : vector<8x32xf32>
    %129 = vector.extract_strided_slice %114 {offsets = [0, 96], sizes = [8, 32], strides = [1, 1]} : vector<8x128xf32> to vector<8x32xf32>
    %130 = arith.negf %129 : vector<8x32xf32>
    %131 = math.exp %130 : vector<8x32xf32>
    %cst_39 = arith.constant 1.000000e+00 : f32
    %132 = vector.broadcast %cst_39 : f32 to vector<8x32xf32>
    %133 = arith.addf %132, %131 : vector<8x32xf32>
    %134 = arith.divf %132, %133 : vector<8x32xf32>
    %135 = arith.mulf %126, %106 : vector<8x32xf32>
    %136 = arith.mulf %120, %128 : vector<8x32xf32>
    %137 = arith.addf %135, %136 : vector<8x32xf32>
    %138 = math.tanh %137 : vector<8x32xf32>
    %139 = arith.mulf %134, %138 : vector<8x32xf32>
    %c4_i32 = arith.constant 4 : i32
    %c8_i32_40 = arith.constant 8 : i32
    %140 = arith.muli %c4_i32, %c8_i32_40 : i32
    %141 = arith.index_cast %140 : i32 to index
    %c0_41 = arith.constant 0 : index
    %142 = vector.load %arg11[%141, %c0_41] : memref<64x128xf32, #tpu.memory_space<vmem>>, vector<8x128xf32>
    %143 = arith.truncf %139 : vector<8x32xf32> to vector<8x32xbf16>
    %cst_42 = arith.constant dense<0.000000e+00> : vector<8x128xf32>
    %144 = tpu.matmul %143, %15, %cst_42 {dimension_numbers = #tpu.dot_dimension_numbers<[1], [0], [0], [1], [0, 0, 1, 1], [], []>} : vector<8x32xbf16>, vector<32x128xbf16>, vector<8x128xf32> -> vector<8x128xf32>
    %145 = arith.addf %142, %144 : vector<8x128xf32>
    %146 = vector.extract_strided_slice %145 {offsets = [0, 0], sizes = [8, 32], strides = [1, 1]} : vector<8x128xf32> to vector<8x32xf32>
    %147 = arith.negf %146 : vector<8x32xf32>
    %148 = math.exp %147 : vector<8x32xf32>
    %cst_43 = arith.constant 1.000000e+00 : f32
    %149 = vector.broadcast %cst_43 : f32 to vector<8x32xf32>
    %150 = arith.addf %149, %148 : vector<8x32xf32>
    %151 = arith.divf %149, %150 : vector<8x32xf32>
    %152 = vector.extract_strided_slice %145 {offsets = [0, 32], sizes = [8, 32], strides = [1, 1]} : vector<8x128xf32> to vector<8x32xf32>
    %153 = arith.negf %152 : vector<8x32xf32>
    %154 = math.exp %153 : vector<8x32xf32>
    %cst_44 = arith.constant 1.000000e+00 : f32
    %155 = vector.broadcast %cst_44 : f32 to vector<8x32xf32>
    %156 = arith.addf %155, %154 : vector<8x32xf32>
    %157 = arith.divf %155, %156 : vector<8x32xf32>
    %158 = vector.extract_strided_slice %145 {offsets = [0, 64], sizes = [8, 32], strides = [1, 1]} : vector<8x128xf32> to vector<8x32xf32>
    %159 = math.tanh %158 : vector<8x32xf32>
    %160 = vector.extract_strided_slice %145 {offsets = [0, 96], sizes = [8, 32], strides = [1, 1]} : vector<8x128xf32> to vector<8x32xf32>
    %161 = arith.negf %160 : vector<8x32xf32>
    %162 = math.exp %161 : vector<8x32xf32>
    %cst_45 = arith.constant 1.000000e+00 : f32
    %163 = vector.broadcast %cst_45 : f32 to vector<8x32xf32>
    %164 = arith.addf %163, %162 : vector<8x32xf32>
    %165 = arith.divf %163, %164 : vector<8x32xf32>
    %166 = arith.mulf %157, %137 : vector<8x32xf32>
    %167 = arith.mulf %151, %159 : vector<8x32xf32>
    %168 = arith.addf %166, %167 : vector<8x32xf32>
    %169 = math.tanh %168 : vector<8x32xf32>
    %170 = arith.mulf %165, %169 : vector<8x32xf32>
    %c5_i32 = arith.constant 5 : i32
    %c8_i32_46 = arith.constant 8 : i32
    %171 = arith.muli %c5_i32, %c8_i32_46 : i32
    %172 = arith.index_cast %171 : i32 to index
    %c0_47 = arith.constant 0 : index
    %173 = vector.load %arg11[%172, %c0_47] : memref<64x128xf32, #tpu.memory_space<vmem>>, vector<8x128xf32>
    %174 = arith.truncf %170 : vector<8x32xf32> to vector<8x32xbf16>
    %cst_48 = arith.constant dense<0.000000e+00> : vector<8x128xf32>
    %175 = tpu.matmul %174, %15, %cst_48 {dimension_numbers = #tpu.dot_dimension_numbers<[1], [0], [0], [1], [0, 0, 1, 1], [], []>} : vector<8x32xbf16>, vector<32x128xbf16>, vector<8x128xf32> -> vector<8x128xf32>
    %176 = arith.addf %173, %175 : vector<8x128xf32>
    %177 = vector.extract_strided_slice %176 {offsets = [0, 0], sizes = [8, 32], strides = [1, 1]} : vector<8x128xf32> to vector<8x32xf32>
    %178 = arith.negf %177 : vector<8x32xf32>
    %179 = math.exp %178 : vector<8x32xf32>
    %cst_49 = arith.constant 1.000000e+00 : f32
    %180 = vector.broadcast %cst_49 : f32 to vector<8x32xf32>
    %181 = arith.addf %180, %179 : vector<8x32xf32>
    %182 = arith.divf %180, %181 : vector<8x32xf32>
    %183 = vector.extract_strided_slice %176 {offsets = [0, 32], sizes = [8, 32], strides = [1, 1]} : vector<8x128xf32> to vector<8x32xf32>
    %184 = arith.negf %183 : vector<8x32xf32>
    %185 = math.exp %184 : vector<8x32xf32>
    %cst_50 = arith.constant 1.000000e+00 : f32
    %186 = vector.broadcast %cst_50 : f32 to vector<8x32xf32>
    %187 = arith.addf %186, %185 : vector<8x32xf32>
    %188 = arith.divf %186, %187 : vector<8x32xf32>
    %189 = vector.extract_strided_slice %176 {offsets = [0, 64], sizes = [8, 32], strides = [1, 1]} : vector<8x128xf32> to vector<8x32xf32>
    %190 = math.tanh %189 : vector<8x32xf32>
    %191 = vector.extract_strided_slice %176 {offsets = [0, 96], sizes = [8, 32], strides = [1, 1]} : vector<8x128xf32> to vector<8x32xf32>
    %192 = arith.negf %191 : vector<8x32xf32>
    %193 = math.exp %192 : vector<8x32xf32>
    %cst_51 = arith.constant 1.000000e+00 : f32
    %194 = vector.broadcast %cst_51 : f32 to vector<8x32xf32>
    %195 = arith.addf %194, %193 : vector<8x32xf32>
    %196 = arith.divf %194, %195 : vector<8x32xf32>
    %197 = arith.mulf %188, %168 : vector<8x32xf32>
    %198 = arith.mulf %182, %190 : vector<8x32xf32>
    %199 = arith.addf %197, %198 : vector<8x32xf32>
    %200 = math.tanh %199 : vector<8x32xf32>
    %201 = arith.mulf %196, %200 : vector<8x32xf32>
    %c6_i32 = arith.constant 6 : i32
    %c8_i32_52 = arith.constant 8 : i32
    %202 = arith.muli %c6_i32, %c8_i32_52 : i32
    %203 = arith.index_cast %202 : i32 to index
    %c0_53 = arith.constant 0 : index
    %204 = vector.load %arg11[%203, %c0_53] : memref<64x128xf32, #tpu.memory_space<vmem>>, vector<8x128xf32>
    %205 = arith.truncf %201 : vector<8x32xf32> to vector<8x32xbf16>
    %cst_54 = arith.constant dense<0.000000e+00> : vector<8x128xf32>
    %206 = tpu.matmul %205, %15, %cst_54 {dimension_numbers = #tpu.dot_dimension_numbers<[1], [0], [0], [1], [0, 0, 1, 1], [], []>} : vector<8x32xbf16>, vector<32x128xbf16>, vector<8x128xf32> -> vector<8x128xf32>
    %207 = arith.addf %204, %206 : vector<8x128xf32>
    %208 = vector.extract_strided_slice %207 {offsets = [0, 0], sizes = [8, 32], strides = [1, 1]} : vector<8x128xf32> to vector<8x32xf32>
    %209 = arith.negf %208 : vector<8x32xf32>
    %210 = math.exp %209 : vector<8x32xf32>
    %cst_55 = arith.constant 1.000000e+00 : f32
    %211 = vector.broadcast %cst_55 : f32 to vector<8x32xf32>
    %212 = arith.addf %211, %210 : vector<8x32xf32>
    %213 = arith.divf %211, %212 : vector<8x32xf32>
    %214 = vector.extract_strided_slice %207 {offsets = [0, 32], sizes = [8, 32], strides = [1, 1]} : vector<8x128xf32> to vector<8x32xf32>
    %215 = arith.negf %214 : vector<8x32xf32>
    %216 = math.exp %215 : vector<8x32xf32>
    %cst_56 = arith.constant 1.000000e+00 : f32
    %217 = vector.broadcast %cst_56 : f32 to vector<8x32xf32>
    %218 = arith.addf %217, %216 : vector<8x32xf32>
    %219 = arith.divf %217, %218 : vector<8x32xf32>
    %220 = vector.extract_strided_slice %207 {offsets = [0, 64], sizes = [8, 32], strides = [1, 1]} : vector<8x128xf32> to vector<8x32xf32>
    %221 = math.tanh %220 : vector<8x32xf32>
    %222 = vector.extract_strided_slice %207 {offsets = [0, 96], sizes = [8, 32], strides = [1, 1]} : vector<8x128xf32> to vector<8x32xf32>
    %223 = arith.negf %222 : vector<8x32xf32>
    %224 = math.exp %223 : vector<8x32xf32>
    %cst_57 = arith.constant 1.000000e+00 : f32
    %225 = vector.broadcast %cst_57 : f32 to vector<8x32xf32>
    %226 = arith.addf %225, %224 : vector<8x32xf32>
    %227 = arith.divf %225, %226 : vector<8x32xf32>
    %228 = arith.mulf %219, %199 : vector<8x32xf32>
    %229 = arith.mulf %213, %221 : vector<8x32xf32>
    %230 = arith.addf %228, %229 : vector<8x32xf32>
    %231 = math.tanh %230 : vector<8x32xf32>
    %232 = arith.mulf %227, %231 : vector<8x32xf32>
    %c7_i32 = arith.constant 7 : i32
    %c8_i32_58 = arith.constant 8 : i32
    %233 = arith.muli %c7_i32, %c8_i32_58 : i32
    %234 = arith.index_cast %233 : i32 to index
    %c0_59 = arith.constant 0 : index
    %235 = vector.load %arg11[%234, %c0_59] : memref<64x128xf32, #tpu.memory_space<vmem>>, vector<8x128xf32>
    %236 = arith.truncf %232 : vector<8x32xf32> to vector<8x32xbf16>
    %cst_60 = arith.constant dense<0.000000e+00> : vector<8x128xf32>
    %237 = tpu.matmul %236, %15, %cst_60 {dimension_numbers = #tpu.dot_dimension_numbers<[1], [0], [0], [1], [0, 0, 1, 1], [], []>} : vector<8x32xbf16>, vector<32x128xbf16>, vector<8x128xf32> -> vector<8x128xf32>
    %238 = arith.addf %235, %237 : vector<8x128xf32>
    %239 = vector.extract_strided_slice %238 {offsets = [0, 0], sizes = [8, 32], strides = [1, 1]} : vector<8x128xf32> to vector<8x32xf32>
    %240 = arith.negf %239 : vector<8x32xf32>
    %241 = math.exp %240 : vector<8x32xf32>
    %cst_61 = arith.constant 1.000000e+00 : f32
    %242 = vector.broadcast %cst_61 : f32 to vector<8x32xf32>
    %243 = arith.addf %242, %241 : vector<8x32xf32>
    %244 = arith.divf %242, %243 : vector<8x32xf32>
    %245 = vector.extract_strided_slice %238 {offsets = [0, 32], sizes = [8, 32], strides = [1, 1]} : vector<8x128xf32> to vector<8x32xf32>
    %246 = arith.negf %245 : vector<8x32xf32>
    %247 = math.exp %246 : vector<8x32xf32>
    %cst_62 = arith.constant 1.000000e+00 : f32
    %248 = vector.broadcast %cst_62 : f32 to vector<8x32xf32>
    %249 = arith.addf %248, %247 : vector<8x32xf32>
    %250 = arith.divf %248, %249 : vector<8x32xf32>
    %251 = vector.extract_strided_slice %238 {offsets = [0, 64], sizes = [8, 32], strides = [1, 1]} : vector<8x128xf32> to vector<8x32xf32>
    %252 = math.tanh %251 : vector<8x32xf32>
    %253 = vector.extract_strided_slice %238 {offsets = [0, 96], sizes = [8, 32], strides = [1, 1]} : vector<8x128xf32> to vector<8x32xf32>
    %254 = arith.negf %253 : vector<8x32xf32>
    %255 = math.exp %254 : vector<8x32xf32>
    %cst_63 = arith.constant 1.000000e+00 : f32
    %256 = vector.broadcast %cst_63 : f32 to vector<8x32xf32>
    %257 = arith.addf %256, %255 : vector<8x32xf32>
    %258 = arith.divf %256, %257 : vector<8x32xf32>
    %259 = arith.mulf %250, %230 : vector<8x32xf32>
    %260 = arith.mulf %244, %252 : vector<8x32xf32>
    %261 = arith.addf %259, %260 : vector<8x32xf32>
    %262 = math.tanh %261 : vector<8x32xf32>
    %263 = arith.mulf %258, %262 : vector<8x32xf32>
    %c8_i32_64 = arith.constant 8 : i32
    %264 = arith.truncf %263 : vector<8x32xf32> to vector<8x32xbf16>
    %c0_65 = arith.constant 0 : index
    %c0_66 = arith.constant 0 : index
    %265 = vector.load %arg8[%c0_65, %c0_66] : memref<32x128xbf16, #tpu.memory_space<vmem>>, vector<32x128xbf16>
    %cst_67 = arith.constant dense<0.000000e+00> : vector<8x128xf32>
    %266 = tpu.matmul %264, %265, %cst_67 {dimension_numbers = #tpu.dot_dimension_numbers<[1], [0], [0], [1], [0, 0, 1, 1], [], []>} : vector<8x32xbf16>, vector<32x128xbf16>, vector<8x128xf32> -> vector<8x128xf32>
    %c0_68 = arith.constant 0 : index
    %c0_69 = arith.constant 0 : index
    %267 = vector.load %arg9[%c0_68, %c0_69] : memref<1x128xf32, #tpu.memory_space<vmem>>, vector<1x128xf32>
    %268 = vector.broadcast %267 : vector<1x128xf32> to vector<8x128xf32>
    %269 = arith.addf %266, %268 : vector<8x128xf32>
    %c0_70 = arith.constant 0 : index
    %c0_71 = arith.constant 0 : index
    %270 = vector.load %arg10[%c0_70, %c0_71] : memref<8x128xf32, #tpu.memory_space<vmem>>, vector<8x128xf32>
    tpu.vector_store %arg10[%c0_70, %c0_71], %269 {strides = array<i32>} : memref<8x128xf32, #tpu.memory_space<vmem>>, vector<8x128xf32>,
    return
  }
  func.func @transform_0(%arg0: i32) -> (i32, i32) {
    %c0_i32 = arith.constant 0 : i32
    %c0_i32_0 = arith.constant 0 : i32
    %c0_i32_1 = arith.constant 0 : i32
    return %c0_i32, %c0_i32_0 : i32, i32
  }
  func.func @transform_1(%arg0: i32) -> (i32, i32) {
    %c0_i32 = arith.constant 0 : i32
    %c0_i32_0 = arith.constant 0 : i32
    %c0_i32_1 = arith.constant 0 : i32
    return %c0_i32, %c0_i32_0 : i32, i32
  }
  func.func @transform_2(%arg0: i32) -> (i32, i32) {
    %c0_i32 = arith.constant 0 : i32
    %c0_i32_0 = arith.constant 0 : i32
    %c0_i32_1 = arith.constant 0 : i32
    return %c0_i32, %c0_i32_0 : i32, i32
  }
  func.func @transform_3(%arg0: i32) -> (i32, i32) {
    %c0_i32 = arith.constant 0 : i32
    %c0_i32_0 = arith.constant 0 : i32
    %c0_i32_1 = arith.constant 0 : i32
    return %c0_i32, %c0_i32_0 : i32, i32
  }
  func.func @transform_4(%arg0: i32) -> (i32, i32) {
    %c0_i32 = arith.constant 0 : i32
    %c0_i32_0 = arith.constant 0 : i32
    %c0_i32_1 = arith.constant 0 : i32
    return %c0_i32, %c0_i32_0 : i32, i32
  }
  func.func @transform_5(%arg0: i32) -> (i32, i32) {
    %c0_i32 = arith.constant 0 : i32
    %c0_i32_0 = arith.constant 0 : i32
    %c0_i32_1 = arith.constant 0 : i32
    return %c0_i32, %c0_i32_0 : i32, i32
  }
  func.func @transform_6(%arg0: i32) -> (i32, i32) {
    %c0_i32 = arith.constant 0 : i32
    %c0_i32_0 = arith.constant 0 : i32
    %c0_i32_1 = arith.constant 0 : i32
    return %c0_i32, %c0_i32_0 : i32, i32
  }
  func.func @transform_7(%arg0: i32) -> (i32, i32) {
    %c0_i32 = arith.constant 0 : i32
    %c0_i32_0 = arith.constant 0 : i32
    %c0_i32_1 = arith.constant 0 : i32
    return %c0_i32, %c0_i32_0 : i32, i32
  }
  func.func @transform_8(%arg0: i32) -> (i32, i32) {
    %c0_i32 = arith.constant 0 : i32
    %c0_i32_0 = arith.constant 0 : i32
    %c0_i32_1 = arith.constant 0 : i32
    return %c0_i32, %c0_i32_0 : i32, i32
  }
  func.func @transform_9(%arg0: i32) -> (i32, i32) {
    %c0_i32 = arith.constant 0 : i32
    %c0_i32_0 = arith.constant 0 : i32
    %c0_i32_1 = arith.constant 0 : i32
    return %c0_i32, %c0_i32_0 : i32, i32
  }
}

</mosaic_0001>

<llo_original>
// kernel: encode_forward.1
$region0: #{encode_forward.1}
  #allocation0 [shape = 'u32[]', space=smem, size = 0x4, offset = 0x4, fixed_abs, tag = 'smem constant byte address 0x4 - core index']
  #allocation1 [shape = 'u32[72,128]{1,0:T(1,128)}', space=vmem, size = 0x9000, scoped, tag = 'internal scratch']
  #allocation2 [shape = 'f32[64,128]{1,0:T(8,128)}', space=vmem, size = 0x8000, scoped, tag = 'scratch operand']
  %s0 = inlined_call_operand.vmem [shape: f32[64,16], index: 0, kind: input, shape index: {}]
  %s1 = inlined_call_operand.vmem [shape: f32[8,8], index: 1, kind: input, shape index: {}]
  %s2 = inlined_call_operand.vmem [shape: bf16[16,128], index: 2, kind: input, shape index: {}]
  %s3 = inlined_call_operand.vmem [shape: bf16[32,128], index: 3, kind: input, shape index: {}]
  %s4 = inlined_call_operand.vmem [shape: f32[1,128], index: 4, kind: input, shape index: {}]
  %s5 = inlined_call_operand.vmem [shape: f32[8,32], index: 5, kind: input, shape index: {}]
  %s6 = inlined_call_operand.vmem [shape: f32[1,32], index: 6, kind: input, shape index: {}]
  %s7 = inlined_call_operand.vmem [shape: bf16[32,128], index: 7, kind: input, shape index: {}]
  %s8 = inlined_call_operand.vmem [shape: f32[1,128], index: 8, kind: input, shape index: {}]
  %s9 = inlined_call_operand.vmem [shape: f32[8,128], index: 9, kind: output, shape index: {}]
  %s10 = sld [smem:[#allocation0]]
  $region46: #{encode_forward.1} parent=0
    _
  %s12 = ssub.s32 1, %s10
  %s13 = scalar_select 0, %s12, %s10
  // Predicated region
  $region2: #{encode_forward.1} parent=0 // pred_check
    _
  $region3: #{encode_forward.1} parent=0 // pred_check_branch
    %15 = sbr.rel (0) target = $region5
  $region4: #{encode_forward.1} parent=0 // pred_region
    _
  $region5: #{encode_forward.1} parent=0 // pred_fallthru
    _
  // Predicated region
  $region6: #{encode_forward.1} parent=0 // pred_check
    _
  $region7: #{encode_forward.1} parent=0 // pred_check_branch
    %17 = sbr.rel (0) target = $region9
  $region8: #{encode_forward.1} parent=0 // pred_region
    _
  $region9: #{encode_forward.1} parent=0 // pred_fallthru
    _
  // Predicated region
  $region10: #{encode_forward.1} parent=0 // pred_check
    _
  $region11: #{encode_forward.1} parent=0 // pred_check_branch
    %19 = sbr.rel (0) target = $region13
  $region12: #{encode_forward.1} parent=0 // pred_region
    _
  $region13: #{encode_forward.1} parent=0 // pred_fallthru
    _
  // Predicated region
  $region14: #{encode_forward.1} parent=0 // pred_check
    _
  $region15: #{encode_forward.1} parent=0 // pred_check_branch
    %21 = sbr.rel (0) target = $region17
  $region16: #{encode_forward.1} parent=0 // pred_region
    _
  $region17: #{encode_forward.1} parent=0 // pred_fallthru
    _
  // Predicated region
  $region18: #{encode_forward.1} parent=0 // pred_check
    _
  $region19: #{encode_forward.1} parent=0 // pred_check_branch
    %23 = sbr.rel (0) target = $region21
  $region20: #{encode_forward.1} parent=0 // pred_region
    _
  $region21: #{encode_forward.1} parent=0 // pred_fallthru
    _
  // Predicated region
  $region22: #{encode_forward.1} parent=0 // pred_check
    _
  $region23: #{encode_forward.1} parent=0 // pred_check_branch
    %25 = sbr.rel (0) target = $region25
  $region24: #{encode_forward.1} parent=0 // pred_region
    _
  $region25: #{encode_forward.1} parent=0 // pred_fallthru
    _
  // Predicated region
  $region26: #{encode_forward.1} parent=0 // pred_check
    _
  $region27: #{encode_forward.1} parent=0 // pred_check_branch
    %27 = sbr.rel (0) target = $region29
  $region28: #{encode_forward.1} parent=0 // pred_region
    _
  $region29: #{encode_forward.1} parent=0 // pred_fallthru
    _
  // Predicated region
  $region30: #{encode_forward.1} parent=0 // pred_check
    _
  $region31: #{encode_forward.1} parent=0 // pred_check_branch
    %29 = sbr.rel (0) target = $region33
  $region32: #{encode_forward.1} parent=0 // pred_region
    _
  $region33: #{encode_forward.1} parent=0 // pred_fallthru
    _
  // Predicated region
  $region34: #{encode_forward.1} parent=0 // pred_check
    _
  $region35: #{encode_forward.1} parent=0 // pred_check_branch
    %31 = sbr.rel (0) target = $region37
  $region36: #{encode_forward.1} parent=0 // pred_region
    _
  $region37: #{encode_forward.1} parent=0 // pred_fallthru
    _
  %v33 = vld [vmem:[%s0] sm:$0xff]
  %v34 = vld [vmem:[%s0 + $0x8] sm:$0xff]
  %v35 = vld [vmem:[%s0 + $0x10] sm:$0xff]
  %v36 = vld [vmem:[%s0 + $0x18] sm:$0xff]
  %v37 = vld [vmem:[%s0 + $0x20] sm:$0xff]
  %v38 = vld [vmem:[%s0 + $0x28] sm:$0xff]
  %v39 = vld [vmem:[%s0 + $0x30] sm:$0xff]
  %v40 = vld [vmem:[%s0 + $0x38] sm:$0xff]
  %v41 = vpack.c.bf16 %v34, %v33
  %v42 = vpack.c.bf16 %v36, %v35
  %v43 = vpack.c.bf16 %v38, %v37
  %v44 = vpack.c.bf16 %v40, %v39
  %v45 = vld [vmem:[%s2] sm:$0xf]
  %v46 = vld [vmem:[%s2 + $0x4] sm:$0xf]
  %v47 = vld [vmem:[%s4] sm:$0x1]
  %v49 = vperm.slane %v47, 0
  %v53 = vunpack.c.l.b16 %v45
  %v54 = vunpack.c.l.b16 %v46
  %v55 = vpack.c.b16 %v54, %v53
  %vm57 = vcmask 130048
  %v59 = vsel %vm57, %v41, 0
  %v62 = vsel %vm57, %v42, 0
  %v65 = vsel %vm57, %v43, 0
  %v68 = vsel %vm57, %v44, 0
  %70 = vmatpush.bf16.msra.mxu0 0
  %71 = vmatpush.bf16.msra.mxu0 0
  %72 = vmatpush.bf16.msra.mxu0 0
  %73 = vmatpush.bf16.msra.mxu0 0
  %74 = vmatpush.bf16.msra.mxu0 0
  %75 = vmatpush.bf16.msra.mxu0 0
  %76 = vmatpush.bf16.msra.mxu0 0
  %77 = vmatpush.bf16.msra.mxu0 %v55
  %78 = vmatmul.bf16.gmra.mxu0 %v59
  %v79 = vpop.f32.mrf.mxu0
  %v80 = vadd.f32 %v49, %v79
  %v81 = vpop.f32.mrf.mxu0
  %v82 = vadd.f32 %v49, %v81
  %83 = vmatmul.bf16.gmra.mxu0 %v62
  %v84 = vpop.f32.mrf.mxu0
  %v85 = vadd.f32 %v49, %v84
  %v86 = vpop.f32.mrf.mxu0
  %v87 = vadd.f32 %v49, %v86
  %88 = vmatmul.bf16.gmra.mxu0 %v65
  %v89 = vpop.f32.mrf.mxu0
  %v90 = vadd.f32 %v49, %v89
  %v91 = vpop.f32.mrf.mxu0
  %v92 = vadd.f32 %v49, %v91
  %93 = vmatmul.bf16.gmra.mxu0 %v68
  %v94 = vpop.f32.mrf.mxu0
  %v95 = vadd.f32 %v49, %v94
  %v96 = vpop.f32.mrf.mxu0
  %v97 = vadd.f32 %v49, %v96
  %98 = vdwg.mxu0
  %99 = vst [vmem:[#allocation2] sm:$0xff] %v80
  %100 = vst [vmem:[#allocation2 + $0x8] sm:$0xff] %v82
  %101 = vst [vmem:[#allocation2 + $0x10] sm:$0xff] %v85
  %102 = vst [vmem:[#allocation2 + $0x18] sm:$0xff] %v87
  %103 = vst [vmem:[#allocation2 + $0x20] sm:$0xff] %v90
  %104 = vst [vmem:[#allocation2 + $0x28] sm:$0xff] %v92
  %105 = vst [vmem:[#allocation2 + $0x30] sm:$0xff] %v95
  %106 = vst [vmem:[#allocation2 + $0x38] sm:$0xff] %v97
  %v107 = vld [vmem:[%s1] sm:$0xff]
  %v108 = vld [vmem:[%s5] sm:$0xff]
  %v109 = vld [vmem:[%s6] sm:$0x1]
  %v111 = vperm.slane %v109, 0
  %vm113 = vcmask 64512
  %v115 = vsel %vm113, %v107, 0
  %117 = vmatpush.msra.mxu0 0.0
  %118 = vmatpush.msra.mxu0 0.0
  %119 = vmatpush.msra.mxu0 0.0
  %120 = vmatpush.msra.mxu0 0.0
  %121 = vmatpush.msra.mxu0 0.0
  %122 = vmatpush.msra.mxu0 0.0
  %123 = vmatpush.msra.mxu0 0.0
  %124 = vmatpush.msra.mxu0 0.0
  %125 = vmatpush.msra.mxu0 0.0
  %126 = vmatpush.msra.mxu0 0.0
  %127 = vmatpush.msra.mxu0 0.0
  %128 = vmatpush.msra.mxu0 0.0
  %129 = vmatpush.msra.mxu0 0.0
  %130 = vmatpush.msra.mxu0 0.0
  %131 = vmatpush.msra.mxu0 0.0
  %132 = vmatpush.msra.mxu0 %v108
  %133 = vmatmul.f32.gmra.mxu0 %v115
  %v134 = vpop.f32.mrf.mxu0
  %v135 = vadd.f32 %v111, %v134
  %136 = vdwg.mxu0
  %v137 = vld [vmem:[%s3] sm:$0xf]
  %v138 = vld [vmem:[%s3 + $0x4] sm:$0xf]
  %v139 = vld [vmem:[%s3 + $0x8] sm:$0xf]
  %v140 = vld [vmem:[%s3 + $0xc] sm:$0xf]
  %v141 = vld [vmem:[#allocation2] sm:$0xff]
  %v142 = vpack.c.bf16 %v135, %v135
  %v147 = vunpack.c.l.b16 %v137
  %v148 = vunpack.c.l.b16 %v138
  %v149 = vunpack.c.l.b16 %v139
  %v150 = vunpack.c.l.b16 %v140
  %v151 = vpack.c.b16 %v148, %v147
  %v152 = vpack.c.b16 %v150, %v149
  %vm155 = vcmask 261120
  %v157 = vsel %vm155, %v142, 0
  %159 = vmatpush.bf16.msra.mxu0 0
  %160 = vmatpush.bf16.msra.mxu0 0
  %161 = vmatpush.bf16.msra.mxu0 0
  %162 = vmatpush.bf16.msra.mxu0 0
  %163 = vmatpush.bf16.msra.mxu0 0
  %164 = vmatpush.bf16.msra.mxu0 0
  %165 = vmatpush.bf16.msra.mxu0 %v152
  %166 = vmatpush.bf16.msra.mxu0 %v151
  %167 = vmatmul.bf16.gmra.mxu0 %v157
  %v168 = vpop.f32.mrf.mxu0
  %v169 = vadd.f32 0.0, %v168
  %v170 = vpop.f32.mrf.mxu0
  %171 = vdwg.mxu0
  %v172 = vadd.f32 %v141, %v169
  %v173 = vxor.u32 %v172, 2147483648
  %v174 = vmul.f32 %v173, 1.442695
  %v175 = vpow.pop %v174
  %v176 = vadd.f32 %v175, 1.0
  %v177 = vrcp.pop %v176
  %v178 = vmul.f32 %v176, %v177
  %v179 = vsub.f32 1.0, %v178
  %v180 = vmul.f32 %v177, %v179
  %v181 = vadd.f32 %v177, %v180
  %vm182 = vweird.f32 %v176
  %vm183 = vweird.f32 %v177
  %vm184 = vmor %vm182, %vm183
  %v185 = vsel %vm184, %v177, %v181
  %v186 = vand.u32 2147483647, %v176
  %vm187 = vcmp.eq.f32.partialorder %v186, 8.507059e+37
  %v188 = vand.u32 %v176, 2147483648
  %v189 = vor.u32 1.1754944e-38, %v188
  %v190 = vsel %vm187, %v189, %v185
  %v191 = vmul.f32 1.0, %v190
  %v192 = vtanh.pop %v172
  %v193 = vmul.f32 %v191, 0.0
  %195 = vrot.lane.b32.xlu0 %v192, 64
  %v196 = vpop.permute.xlu0 %195
  %v198 = vmul.f32 %v191, %v196
  %200 = vrot.lane.b32.xlu0 %v198, 32
  %v201 = vpop.permute.xlu0 %200
  %v203 = vadd.f32 %v193, %v201
  %v204 = vtanh.pop %v203
  %206 = vrot.lane.b32.xlu0 %v204, 64
  %v207 = vpop.permute.xlu0 %206
  %v209 = vmul.f32 %v191, %v207
  %v210 = vld [vmem:[#allocation2 + $0x8] sm:$0xff]
  %v211 = vpack.c.bf16 %v209, %v209
  %213 = vrot.lane.b32.xlu0 %v211, 32
  %v214 = vpop.permute.xlu0 %213
  %v216 = vsel %vm155, %v214, 0
  %218 = vmatpush.bf16.msra.mxu0 0
  %219 = vmatpush.bf16.msra.mxu0 0
  %220 = vmatpush.bf16.msra.mxu0 0
  %221 = vmatpush.bf16.msra.mxu0 0
  %222 = vmatpush.bf16.msra.mxu0 0
  %223 = vmatpush.bf16.msra.mxu0 0
  %224 = vmatpush.bf16.msra.mxu0 %v152
  %225 = vmatpush.bf16.msra.mxu0 %v151
  %226 = vmatmul.bf16.gmra.mxu0 %v216
  %v227 = vpop.f32.mrf.mxu0
  %v228 = vadd.f32 0.0, %v227
  %v229 = vpop.f32.mrf.mxu0
  %230 = vdwg.mxu0
  %v231 = vadd.f32 %v210, %v228
  %v232 = vxor.u32 %v231, 2147483648
  %v233 = vmul.f32 %v232, 1.442695
  %v234 = vpow.pop %v233
  %v235 = vadd.f32 %v234, 1.0
  %v236 = vrcp.pop %v235
  %v237 = vmul.f32 %v235, %v236
  %v238 = vsub.f32 1.0, %v237
  %v239 = vmul.f32 %v236, %v238
  %v240 = vadd.f32 %v236, %v239
  %vm241 = vweird.f32 %v235
  %vm242 = vweird.f32 %v236
  %vm243 = vmor %vm241, %vm242
  %v244 = vsel %vm243, %v236, %v240
  %v245 = vand.u32 2147483647, %v235
  %vm246 = vcmp.eq.f32.partialorder %v245, 8.507059e+37
  %v247 = vand.u32 %v235, 2147483648
  %v248 = vor.u32 1.1754944e-38, %v247
  %v249 = vsel %vm246, %v248, %v244
  %v250 = vmul.f32 1.0, %v249
  %v251 = vtanh.pop %v231
  %v252 = vmul.f32 %v250, %v203
  %254 = vrot.lane.b32.xlu0 %v251, 64
  %v255 = vpop.permute.xlu0 %254
  %v257 = vmul.f32 %v250, %v255
  %259 = vrot.lane.b32.xlu0 %v257, 32
  %v260 = vpop.permute.xlu0 %259
  %v262 = vadd.f32 %v252, %v260
  %v263 = vtanh.pop %v262
  %265 = vrot.lane.b32.xlu0 %v263, 64
  %v266 = vpop.permute.xlu0 %265
  %v268 = vmul.f32 %v250, %v266
  %v269 = vld [vmem:[#allocation2 + $0x10] sm:$0xff]
  %v270 = vpack.c.bf16 %v268, %v268
  %272 = vrot.lane.b32.xlu0 %v270, 32
  %v273 = vpop.permute.xlu0 %272
  %v275 = vsel %vm155, %v273, 0
  %277 = vmatpush.bf16.msra.mxu0 0
  %278 = vmatpush.bf16.msra.mxu0 0
  %279 = vmatpush.bf16.msra.mxu0 0
  %280 = vmatpush.bf16.msra.mxu0 0
  %281 = vmatpush.bf16.msra.mxu0 0
  %282 = vmatpush.bf16.msra.mxu0 0
  %283 = vmatpush.bf16.msra.mxu0 %v152
  %284 = vmatpush.bf16.msra.mxu0 %v151
  %285 = vmatmul.bf16.gmra.mxu0 %v275
  %v286 = vpop.f32.mrf.mxu0
  %v287 = vadd.f32 0.0, %v286
  %v288 = vpop.f32.mrf.mxu0
  %289 = vdwg.mxu0
  %v290 = vadd.f32 %v269, %v287
  %v291 = vxor.u32 %v290, 2147483648
  %v292 = vmul.f32 %v291, 1.442695
  %v293 = vpow.pop %v292
  %v294 = vadd.f32 %v293, 1.0
  %v295 = vrcp.pop %v294
  %v296 = vmul.f32 %v294, %v295
  %v297 = vsub.f32 1.0, %v296
  %v298 = vmul.f32 %v295, %v297
  %v299 = vadd.f32 %v295, %v298
  %vm300 = vweird.f32 %v294
  %vm301 = vweird.f32 %v295
  %vm302 = vmor %vm300, %vm301
  %v303 = vsel %vm302, %v295, %v299
  %v304 = vand.u32 2147483647, %v294
  %vm305 = vcmp.eq.f32.partialorder %v304, 8.507059e+37
  %v306 = vand.u32 %v294, 2147483648
  %v307 = vor.u32 1.1754944e-38, %v306
  %v308 = vsel %vm305, %v307, %v303
  %v309 = vmul.f32 1.0, %v308
  %v310 = vtanh.pop %v290
  %v311 = vmul.f32 %v309, %v262
  %313 = vrot.lane.b32.xlu0 %v310, 64
  %v314 = vpop.permute.xlu0 %313
  %v316 = vmul.f32 %v309, %v314
  %318 = vrot.lane.b32.xlu0 %v316, 32
  %v319 = vpop.permute.xlu0 %318
  %v321 = vadd.f32 %v311, %v319
  %v322 = vtanh.pop %v321
  %324 = vrot.lane.b32.xlu0 %v322, 64
  %v325 = vpop.permute.xlu0 %324
  %v327 = vmul.f32 %v309, %v325
  %v328 = vld [vmem:[#allocation2 + $0x18] sm:$0xff]
  %v329 = vpack.c.bf16 %v327, %v327
  %331 = vrot.lane.b32.xlu0 %v329, 32
  %v332 = vpop.permute.xlu0 %331
  %v334 = vsel %vm155, %v332, 0
  %336 = vmatpush.bf16.msra.mxu0 0
  %337 = vmatpush.bf16.msra.mxu0 0
  %338 = vmatpush.bf16.msra.mxu0 0
  %339 = vmatpush.bf16.msra.mxu0 0
  %340 = vmatpush.bf16.msra.mxu0 0
  %341 = vmatpush.bf16.msra.mxu0 0
  %342 = vmatpush.bf16.msra.mxu0 %v152
  %343 = vmatpush.bf16.msra.mxu0 %v151
  %344 = vmatmul.bf16.gmra.mxu0 %v334
  %v345 = vpop.f32.mrf.mxu0
  %v346 = vadd.f32 0.0, %v345
  %v347 = vpop.f32.mrf.mxu0
  %348 = vdwg.mxu0
  %v349 = vadd.f32 %v328, %v346
  %v350 = vxor.u32 %v349, 2147483648
  %v351 = vmul.f32 %v350, 1.442695
  %v352 = vpow.pop %v351
  %v353 = vadd.f32 %v352, 1.0
  %v354 = vrcp.pop %v353
  %v355 = vmul.f32 %v353, %v354
  %v356 = vsub.f32 1.0, %v355
  %v357 = vmul.f32 %v354, %v356
  %v358 = vadd.f32 %v354, %v357
  %vm359 = vweird.f32 %v353
  %vm360 = vweird.f32 %v354
  %vm361 = vmor %vm359, %vm360
  %v362 = vsel %vm361, %v354, %v358
  %v363 = vand.u32 2147483647, %v353
  %vm364 = vcmp.eq.f32.partialorder %v363, 8.507059e+37
  %v365 = vand.u32 %v353, 2147483648
  %v366 = vor.u32 1.1754944e-38, %v365
  %v367 = vsel %vm364, %v366, %v362
  %v368 = vmul.f32 1.0, %v367
  %v369 = vtanh.pop %v349
  %v370 = vmul.f32 %v368, %v321
  %372 = vrot.lane.b32.xlu0 %v369, 64
  %v373 = vpop.permute.xlu0 %372
  %v375 = vmul.f32 %v368, %v373
  %377 = vrot.lane.b32.xlu0 %v375, 32
  %v378 = vpop.permute.xlu0 %377
  %v380 = vadd.f32 %v370, %v378
  %v381 = vtanh.pop %v380
  %383 = vrot.lane.b32.xlu0 %v381, 64
  %v384 = vpop.permute.xlu0 %383
  %v386 = vmul.f32 %v368, %v384
  %v387 = vld [vmem:[#allocation2 + $0x20] sm:$0xff]
  %v388 = vpack.c.bf16 %v386, %v386
  %390 = vrot.lane.b32.xlu0 %v388, 32
  %v391 = vpop.permute.xlu0 %390
  %v393 = vsel %vm155, %v391, 0
  %395 = vmatpush.bf16.msra.mxu0 0
  %396 = vmatpush.bf16.msra.mxu0 0
  %397 = vmatpush.bf16.msra.mxu0 0
  %398 = vmatpush.bf16.msra.mxu0 0
  %399 = vmatpush.bf16.msra.mxu0 0
  %400 = vmatpush.bf16.msra.mxu0 0
  %401 = vmatpush.bf16.msra.mxu0 %v152
  %402 = vmatpush.bf16.msra.mxu0 %v151
  %403 = vmatmul.bf16.gmra.mxu0 %v393
  %v404 = vpop.f32.mrf.mxu0
  %v405 = vadd.f32 0.0, %v404
  %v406 = vpop.f32.mrf.mxu0
  %407 = vdwg.mxu0
  %v408 = vadd.f32 %v387, %v405
  %v409 = vxor.u32 %v408, 2147483648
  %v410 = vmul.f32 %v409, 1.442695
  %v411 = vpow.pop %v410
  %v412 = vadd.f32 %v411, 1.0
  %v413 = vrcp.pop %v412
  %v414 = vmul.f32 %v412, %v413
  %v415 = vsub.f32 1.0, %v414
  %v416 = vmul.f32 %v413, %v415
  %v417 = vadd.f32 %v413, %v416
  %vm418 = vweird.f32 %v412
  %vm419 = vweird.f32 %v413
  %vm420 = vmor %vm418, %vm419
  %v421 = vsel %vm420, %v413, %v417
  %v422 = vand.u32 2147483647, %v412
  %vm423 = vcmp.eq.f32.partialorder %v422, 8.507059e+37
  %v424 = vand.u32 %v412, 2147483648
  %v425 = vor.u32 1.1754944e-38, %v424
  %v426 = vsel %vm423, %v425, %v421
  %v427 = vmul.f32 1.0, %v426
  %v428 = vtanh.pop %v408
  %v429 = vmul.f32 %v427, %v380
  %431 = vrot.lane.b32.xlu0 %v428, 64
  %v432 = vpop.permute.xlu0 %431
  %v434 = vmul.f32 %v427, %v432
  %436 = vrot.lane.b32.xlu0 %v434, 32
  %v437 = vpop.permute.xlu0 %436
  %v439 = vadd.f32 %v429, %v437
  %v440 = vtanh.pop %v439
  %442 = vrot.lane.b32.xlu0 %v440, 64
  %v443 = vpop.permute.xlu0 %442
  %v445 = vmul.f32 %v427, %v443
  %v446 = vld [vmem:[#allocation2 + $0x28] sm:$0xff]
  %v447 = vpack.c.bf16 %v445, %v445
  %449 = vrot.lane.b32.xlu0 %v447, 32
  %v450 = vpop.permute.xlu0 %449
  %v452 = vsel %vm155, %v450, 0
  %454 = vmatpush.bf16.msra.mxu0 0
  %455 = vmatpush.bf16.msra.mxu0 0
  %456 = vmatpush.bf16.msra.mxu0 0
  %457 = vmatpush.bf16.msra.mxu0 0
  %458 = vmatpush.bf16.msra.mxu0 0
  %459 = vmatpush.bf16.msra.mxu0 0
  %460 = vmatpush.bf16.msra.mxu0 %v152
  %461 = vmatpush.bf16.msra.mxu0 %v151
  %462 = vmatmul.bf16.gmra.mxu0 %v452
  %v463 = vpop.f32.mrf.mxu0
  %v464 = vadd.f32 0.0, %v463
  %v465 = vpop.f32.mrf.mxu0
  %466 = vdwg.mxu0
  %v467 = vadd.f32 %v446, %v464
  %v468 = vxor.u32 %v467, 2147483648
  %v469 = vmul.f32 %v468, 1.442695
  %v470 = vpow.pop %v469
  %v471 = vadd.f32 %v470, 1.0
  %v472 = vrcp.pop %v471
  %v473 = vmul.f32 %v471, %v472
  %v474 = vsub.f32 1.0, %v473
  %v475 = vmul.f32 %v472, %v474
  %v476 = vadd.f32 %v472, %v475
  %vm477 = vweird.f32 %v471
  %vm478 = vweird.f32 %v472
  %vm479 = vmor %vm477, %vm478
  %v480 = vsel %vm479, %v472, %v476
  %v481 = vand.u32 2147483647, %v471
  %vm482 = vcmp.eq.f32.partialorder %v481, 8.507059e+37
  %v483 = vand.u32 %v471, 2147483648
  %v484 = vor.u32 1.1754944e-38, %v483
  %v485 = vsel %vm482, %v484, %v480
  %v486 = vmul.f32 1.0, %v485
  %v487 = vtanh.pop %v467
  %v488 = vmul.f32 %v486, %v439
  %490 = vrot.lane.b32.xlu0 %v487, 64
  %v491 = vpop.permute.xlu0 %490
  %v493 = vmul.f32 %v486, %v491
  %495 = vrot.lane.b32.xlu0 %v493, 32
  %v496 = vpop.permute.xlu0 %495
  %v498 = vadd.f32 %v488, %v496
  %v499 = vtanh.pop %v498
  %501 = vrot.lane.b32.xlu0 %v499, 64
  %v502 = vpop.permute.xlu0 %501
  %v504 = vmul.f32 %v486, %v502
  %v505 = vld [vmem:[#allocation2 + $0x30] sm:$0xff]
  %v506 = vpack.c.bf16 %v504, %v504
  %508 = vrot.lane.b32.xlu0 %v506, 32
  %v509 = vpop.permute.xlu0 %508
  %v511 = vsel %vm155, %v509, 0
  %513 = vmatpush.bf16.msra.mxu0 0
  %514 = vmatpush.bf16.msra.mxu0 0
  %515 = vmatpush.bf16.msra.mxu0 0
  %516 = vmatpush.bf16.msra.mxu0 0
  %517 = vmatpush.bf16.msra.mxu0 0
  %518 = vmatpush.bf16.msra.mxu0 0
  %519 = vmatpush.bf16.msra.mxu0 %v152
  %520 = vmatpush.bf16.msra.mxu0 %v151
  %521 = vmatmul.bf16.gmra.mxu0 %v511
  %v522 = vpop.f32.mrf.mxu0
  %v523 = vadd.f32 0.0, %v522
  %v524 = vpop.f32.mrf.mxu0
  %525 = vdwg.mxu0
  %v526 = vadd.f32 %v505, %v523
  %v527 = vxor.u32 %v526, 2147483648
  %v528 = vmul.f32 %v527, 1.442695
  %v529 = vpow.pop %v528
  %v530 = vadd.f32 %v529, 1.0
  %v531 = vrcp.pop %v530
  %v532 = vmul.f32 %v530, %v531
  %v533 = vsub.f32 1.0, %v532
  %v534 = vmul.f32 %v531, %v533
  %v535 = vadd.f32 %v531, %v534
  %vm536 = vweird.f32 %v530
  %vm537 = vweird.f32 %v531
  %vm538 = vmor %vm536, %vm537
  %v539 = vsel %vm538, %v531, %v535
  %v540 = vand.u32 2147483647, %v530
  %vm541 = vcmp.eq.f32.partialorder %v540, 8.507059e+37
  %v542 = vand.u32 %v530, 2147483648
  %v543 = vor.u32 1.1754944e-38, %v542
  %v544 = vsel %vm541, %v543, %v539
  %v545 = vmul.f32 1.0, %v544
  %v546 = vtanh.pop %v526
  %v547 = vmul.f32 %v545, %v498
  %549 = vrot.lane.b32.xlu0 %v546, 64
  %v550 = vpop.permute.xlu0 %549
  %v552 = vmul.f32 %v545, %v550
  %554 = vrot.lane.b32.xlu0 %v552, 32
  %v555 = vpop.permute.xlu0 %554
  %v557 = vadd.f32 %v547, %v555
  %v558 = vtanh.pop %v557
  %560 = vrot.lane.b32.xlu0 %v558, 64
  %v561 = vpop.permute.xlu0 %560
  %v563 = vmul.f32 %v545, %v561
  %v564 = vld [vmem:[#allocation2 + $0x38] sm:$0xff]
  %v565 = vpack.c.bf16 %v563, %v563
  %567 = vrot.lane.b32.xlu0 %v565, 32
  %v568 = vpop.permute.xlu0 %567
  %v570 = vsel %vm155, %v568, 0
  %572 = vmatpush.bf16.msra.mxu0 0
  %573 = vmatpush.bf16.msra.mxu0 0
  %574 = vmatpush.bf16.msra.mxu0 0
  %575 = vmatpush.bf16.msra.mxu0 0
  %576 = vmatpush.bf16.msra.mxu0 0
  %577 = vmatpush.bf16.msra.mxu0 0
  %578 = vmatpush.bf16.msra.mxu0 %v152
  %579 = vmatpush.bf16.msra.mxu0 %v151
  %580 = vmatmul.bf16.gmra.mxu0 %v570
  %v581 = vpop.f32.mrf.mxu0
  %v582 = vadd.f32 0.0, %v581
  %v583 = vpop.f32.mrf.mxu0
  %584 = vdwg.mxu0
  %v585 = vadd.f32 %v564, %v582
  %v586 = vxor.u32 %v585, 2147483648
  %v587 = vmul.f32 %v586, 1.442695
  %v588 = vpow.pop %v587
  %v589 = vadd.f32 %v588, 1.0
  %v590 = vrcp.pop %v589
  %v591 = vmul.f32 %v589, %v590
  %v592 = vsub.f32 1.0, %v591
  %v593 = vmul.f32 %v590, %v592
  %v594 = vadd.f32 %v590, %v593
  %vm595 = vweird.f32 %v589
  %vm596 = vweird.f32 %v590
  %vm597 = vmor %vm595, %vm596
  %v598 = vsel %vm597, %v590, %v594
  %v599 = vand.u32 2147483647, %v589
  %vm600 = vcmp.eq.f32.partialorder %v599, 8.507059e+37
  %v601 = vand.u32 %v589, 2147483648
  %v602 = vor.u32 1.1754944e-38, %v601
  %v603 = vsel %vm600, %v602, %v598
  %v604 = vmul.f32 1.0, %v603
  %v605 = vtanh.pop %v585
  %v606 = vmul.f32 %v604, %v557
  %608 = vrot.lane.b32.xlu0 %v605, 64
  %v609 = vpop.permute.xlu0 %608
  %v611 = vmul.f32 %v604, %v609
  %613 = vrot.lane.b32.xlu0 %v611, 32
  %v614 = vpop.permute.xlu0 %613
  %v616 = vadd.f32 %v606, %v614
  %v617 = vtanh.pop %v616
  %619 = vrot.lane.b32.xlu0 %v617, 64
  %v620 = vpop.permute.xlu0 %619
  %v622 = vmul.f32 %v604, %v620
  %v623 = vpack.c.bf16 %v622, %v622
  %v624 = vld [vmem:[%s7] sm:$0xf]
  %v625 = vld [vmem:[%s7 + $0x4] sm:$0xf]
  %v626 = vld [vmem:[%s7 + $0x8] sm:$0xf]
  %v627 = vld [vmem:[%s7 + $0xc] sm:$0xf]
  %v628 = vld [vmem:[%s8] sm:$0x1]
  %v630 = vperm.slane %v628, 0
  %633 = vrot.lane.b32.xlu0 %v623, 32
  %v634 = vpop.permute.xlu0 %633
  %v639 = vunpack.c.l.b16 %v624
  %v640 = vunpack.c.l.b16 %v625
  %v641 = vunpack.c.l.b16 %v626
  %v642 = vunpack.c.l.b16 %v627
  %v643 = vpack.c.b16 %v640, %v639
  %v644 = vpack.c.b16 %v642, %v641
  %v648 = vsel %vm155, %v634, 0
  %650 = vmatpush.bf16.msra.mxu0 0
  %651 = vmatpush.bf16.msra.mxu0 0
  %652 = vmatpush.bf16.msra.mxu0 0
  %653 = vmatpush.bf16.msra.mxu0 0
  %654 = vmatpush.bf16.msra.mxu0 0
  %655 = vmatpush.bf16.msra.mxu0 0
  %656 = vmatpush.bf16.msra.mxu0 %v644
  %657 = vmatpush.bf16.msra.mxu0 %v643
  %658 = vmatmul.bf16.gmra.mxu0 %v648
  %v659 = vpop.f32.mrf.mxu0
  %v660 = vadd.f32 %v630, %v659
  %v661 = vpop.f32.mrf.mxu0
  %662 = vdwg.mxu0
  %663 = vst [vmem:[%s9] sm:$0xff] %v660
  // Predicated region
  $region38: #{encode_forward.1} parent=0 // pred_check
    _
  $region39: #{encode_forward.1} parent=0 // pred_check_branch
    %665 = sbr.rel (0) target = $region41
  $region40: #{encode_forward.1} parent=0 // pred_region
    _
  $region41: #{encode_forward.1} parent=0 // pred_fallthru
    _
  // Predicated region
  $region42: #{encode_forward.1} parent=0 // pred_check
    _
  $region43: #{encode_forward.1} parent=0 // pred_check_branch
    %667 = sbr.rel (0) target = $region45
  $region44: #{encode_forward.1} parent=0 // pred_region
    _
  $region45: #{encode_forward.1} parent=0 // pred_fallthru
    _

</llo_original>
